<compile_context>
chip_gen: v7x
topology: tpu7x:2x2x1
jax: 0.10.0
libtpu: 0.0.40
codegen_flags: <defaults>
</compile_context>

<pallas_src>
import jax
import jax.numpy as jnp
from jax.experimental import pallas as pl
from jax.experimental.pallas import tpu as pltpu


def _cdiv(a, b):
    return -(-a // b)


def _round_up(x, m):
    return _cdiv(x, m) * m


def _lora_linear_kernel(x_ref, wt_ref, xa_ref, bst_ref, bias_ref, o_ref,
                        acc_ref):
    """One (i, j, k) grid step.

    x_ref    : (tm, tk)  input tile                       (compute dtype)
    wt_ref   : (tk, tn)  frozen weight tile, (in, out)    (compute dtype)
    xa_ref   : (tm, r)   precomputed x @ A.T (k-invariant)
    bst_ref  : (r,  tn)  (B * alpha/r).T      (k-invariant)
    bias_ref : (1,  tn)  bias tile (f32)
    o_ref    : (tm, tn)  output tile
    acc_ref  : (tm, tn)  f32 accumulator, resident over k
    """
    k = pl.program_id(2)

    @pl.when(k == 0)
    def _():
        # Bias folded into the accumulator init -> no epilogue VPU add.
        acc_ref[...] = jnp.broadcast_to(bias_ref[...], acc_ref.shape)

    # Canonical x @ W contraction; f32 MXU accumulation over bf16 feeds.
    acc_ref[...] += jnp.dot(x_ref[...], wt_ref[...],
                            preferred_element_type=jnp.float32)

    @pl.when(k == pl.num_programs(2) - 1)
    def _():
        # (tm, r) @ (r, tn); the alpha/r scale is already folded into bst.
        lora = jnp.dot(xa_ref[...], bst_ref[...],
                       preferred_element_type=jnp.float32)
        o_ref[...] = (acc_ref[...] + lora).astype(o_ref.dtype)


def _tpu_vmem_capacity():
    """Best-effort VMEM capacity query; falls back to v7x's 64 MiB/TC floor."""
    vmem_bytes = 64 * 1024 * 1024
    try:
        info = pltpu.get_tpu_info()
        vmem_bytes = int(getattr(info, "vmem_capacity_bytes", vmem_bytes))
    except Exception:
        pass
    return vmem_bytes


def _choose_tile(dim, cap, granules):
    """Largest sensible tile <= ~cap that is a multiple of one of `granules`
    (larger granule preferred).  Prefers exact divisors of `dim` (no padding);
    otherwise the caller zero-pads `dim` up to a tile multiple."""
    gmin = granules[-1]
    cap = max((cap // gmin) * gmin, gmin)
    if dim <= cap:
        for g in granules:
            if dim % g == 0:
                return dim
        return _round_up(dim, granules[0])
    for g in granules:
        limit = (cap // g) * g
        floor = max(g, limit // 4)
        for cand in range(limit, floor - 1, -g):
            if dim % cand == 0:
                return cand
    return max(gmin, (cap // granules[0]) * granules[0])


def prepare_lora_linear_params(w, bias, b, alpha, *,
                               compute_dtype=jnp.bfloat16):
    """One-time preprocessing of the frozen base weight and LoRA-B.

    Hoist this to parameter-setup / checkpoint-load time so the per-call
    forward does not re-pay the full HBM round trip of transposing W.
    Returns (wt, bst, bias2) ready for lora_linear_prepared().
    """
    r = b.shape[1]
    scale = float(alpha) / float(r)
    wt = jnp.asarray(w).T.astype(compute_dtype)                       # (in, out)
    bst = (jnp.asarray(b).astype(jnp.float32) * scale).T.astype(compute_dtype)  # (r, out)
    bias2 = jnp.asarray(bias).astype(jnp.float32).reshape(1, -1)      # (1, out)
    return wt, bst, bias2


def lora_linear_prepared(x, a, wt, bst, bias2, *,
                         tm_cap=512, tn_cap=1024, tk_cap=1024,
                         wt_buffers=None):
    """y = x @ W.T + bias + (x @ A.T @ B.T) * (alpha/r), with W.T / (B*s).T /
    bias pre-prepared by prepare_lora_linear_params()."""
    compute_dtype = wt.dtype
    orig_shape = x.shape
    in_dim, out_dim = wt.shape
    r = a.shape[0]
    out_dtype = x.dtype

    x2 = x.reshape(-1, in_dim)
    M = x2.shape[0]

    cbytes = jnp.dtype(compute_dtype).itemsize
    obytes = jnp.dtype(out_dtype).itemsize

    # LoRA-A projection hoisted out of the kernel, accumulated in f32, then
    # cast to the MXU feed dtype.
    xa = jnp.dot(x2, a.T, preferred_element_type=jnp.float32).astype(compute_dtype)
    x2c = x2.astype(compute_dtype)

    # Tile selection: 16-row sublane granule for bf16 packing on M, 256-aligned
    # lane tiles for N/K (matches v6e/v7x 2x256^2 MXUs; multiple of v5e's 128).
    m_granule = 16 if cbytes < 4 else 8
    tm = _choose_tile(M, tm_cap, (m_granule,))
    tn = _choose_tile(out_dim, tn_cap, (256, 128))
    tk = _choose_tile(in_dim, tk_cap, (256, 128))

    # Keep >=2 blocks on a parallel grid axis when possible so v7x's two
    # TensorCores (and megacore sharding in general) both get work.
    if _cdiv(M, tm) == 1 and _cdiv(out_dim, tn) == 1:
        half_n = _round_up(tn // 2, 128) if tn >= 256 else 0
        if half_n and _round_up(out_dim, 128) % half_n == 0:
            tn = half_n
        elif tm >= 2 * m_granule:
            tm = _round_up(tm // 2, m_granule)

    # Generation-aware VMEM budget (v7x: 64 MiB/TC; v5e/v6e: 128 MiB).
    vmem_cap = _tpu_vmem_capacity()
    budget = int(0.6 * vmem_cap)

    def tile_bytes(tm_, tn_, tk_):
        return (2 * tm_ * tk_ * cbytes + 2 * tk_ * tn_ * cbytes     # x, W.T (dbl-buffered)
                + 2 * tm_ * r * cbytes + 2 * r * tn_ * cbytes       # xa, (B*s).T
                + 2 * tn_ * 4                                       # bias
                + 2 * tm_ * tn_ * obytes                            # output
                + tm_ * tn_ * 4)                                    # f32 accumulator

    while tile_bytes(tm, tn, tk) > budget:
        if tk > 256:
            tk = _round_up(tk // 2, 128)
        elif tn > 256:
            tn = _round_up(tn // 2, 128)
        elif tm > 2 * m_granule:
            tm = _round_up(tm // 2, m_granule)
        else:
            break

    padded_m = _round_up(M, tm)
    padded_n = _round_up(out_dim, tn)
    padded_k = _round_up(in_dim, tk)
    grid = (padded_m // tm, padded_n // tn, padded_k // tk)
    gi, gj, gk = grid

    def pad2(arr, rows, cols):
        pr, pc = rows - arr.shape[0], cols - arr.shape[1]
        return arr if (pr == 0 and pc == 0) else jnp.pad(arr, ((0, pr), (0, pc)))

    x2p = pad2(x2c, padded_m, padded_k)
    wtp = pad2(wt, padded_k, padded_n)
    xap = pad2(xa, padded_m, r)
    bstp = pad2(bst, r, padded_n)
    biasp = pad2(bias2, 1, padded_n)

    flops = 2 * padded_m * padded_k * padded_n + 2 * padded_m * r * padded_n
    bytes_accessed = int(
        gi * padded_k * padded_n * cbytes        # W.T re-streamed once per i-block
        + gj * padded_m * padded_k * cbytes      # x re-streamed once per j-block
        + padded_m * r * cbytes                  # x @ A.T
        + gi * r * padded_n * cbytes             # (B*s).T fetched once per (i, j)
        + gi * padded_n * 4                      # bias
        + padded_m * padded_n * obytes)          # output written once

    vmem_limit = int(min(int(0.9 * vmem_cap),
                         max(2 * tile_bytes(tm, tn, tk), 32 * 1024 * 1024)))

    wt_spec_kwargs = {}
    if wt_buffers is not None:
        # e.g. wt_buffers=3 on v5e if profiling shows exposed W-tile DMA.
        wt_spec_kwargs["pipeline_mode"] = pl.Buffered(wt_buffers)

    out = pl.pallas_call(
        _lora_linear_kernel,
        out_shape=jax.ShapeDtypeStruct((padded_m, padded_n), out_dtype),
        grid_spec=pltpu.PrefetchScalarGridSpec(
            num_scalar_prefetch=0,
            grid=grid,
            in_specs=[
                pl.BlockSpec((tm, tk), lambda i, j, k: (i, k)),                   # x
                pl.BlockSpec((tk, tn), lambda i, j, k: (k, j), **wt_spec_kwargs), # W.T
                pl.BlockSpec((tm, r), lambda i, j, k: (i, 0)),                    # x @ A.T
                pl.BlockSpec((r, tn), lambda i, j, k: (0, j)),                    # (B*s).T
                pl.BlockSpec((1, tn), lambda i, j, k: (0, j)),                    # bias
            ],
            out_specs=pl.BlockSpec((tm, tn), lambda i, j, k: (i, j)),
            scratch_shapes=[pltpu.VMEM((tm, tn), jnp.float32)],
        ),
        compiler_params=pltpu.CompilerParams(
            dimension_semantics=("parallel", "parallel", "arbitrary"),
            vmem_limit_bytes=vmem_limit),
        cost_estimate=pl.CostEstimate(
            flops=flops, transcendentals=0, bytes_accessed=bytes_accessed),
    )(x2p, wtp, xap, bstp, biasp)

    if (padded_m, padded_n) != (M, out_dim):
        out = out[:M, :out_dim]
    return out.reshape(*orig_shape[:-1], out_dim)


def lora_linear(x, w, bias, a, b, alpha, *, compute_dtype=jnp.bfloat16,
                **tile_kwargs):
    """Convenience wrapper (prep + kernel). For repeated calls, hoist
    prepare_lora_linear_params() out of the step so the W transpose and
    LoRA-scale fold are paid once."""
    wt, bst, bias2 = prepare_lora_linear_params(w, bias, b, alpha,
                                                compute_dtype=compute_dtype)
    return lora_linear_prepared(x, a, wt, bst, bias2, **tile_kwargs)


def lora_linear_ref(x, w, bias, a, b, alpha):
    r = a.shape[0]
    base = jnp.einsum("...i,oi->...o", x, w) + bias
    lora = jnp.einsum("...r,or->...o", jnp.einsum("...i,ri->...r", x, a), b)
    return base + lora * (alpha / r)


if __name__ == "__main__":
    # Small shapes consistent with a Linear layer wrapped by LoRA.
    batch, seq = 2, 8
    in_dim, out_dim = 256, 256
    r, alpha = 8, 16

    key = jax.random.PRNGKey(0)
    kx, kw, kbias, ka, kb = jax.random.split(key, 5)

    x = jax.random.normal(kx, (batch, seq, in_dim), dtype=jnp.float32)

    # Frozen original nn.Linear params (deterministic synthetic init).
    w = jax.random.normal(kw, (out_dim, in_dim), dtype=jnp.float32) / jnp.sqrt(in_dim)
    bias = jax.random.normal(kbias, (out_dim,), dtype=jnp.float32) * 0.01

    # LoRA params per __init__: A ~ kaiming_normal_(nonlinearity='linear')
    # => N(0, 1/in_dim); B initialized to zeros.
    A = jax.random.normal(ka, (r, in_dim), dtype=jnp.float32) / jnp.sqrt(in_dim)
    B0 = jnp.zeros((out_dim, r), dtype=jnp.float32)
    B1 = jax.random.normal(kb, (out_dim, r), dtype=jnp.float32) / jnp.sqrt(r)

    # --- f32 compute path: tight check of the module semantics --------------
    fwd_f32 = jax.jit(lambda xx, bb: lora_linear(xx, w, bias, A, bb, alpha,
                                                 compute_dtype=jnp.float32))
    y = jax.block_until_ready(fwd_f32(x, B0))       # B == 0 -> base linear only
    y_ref = lora_linear_ref(x, w, bias, A, B0, alpha)
    assert jnp.allclose(y, y_ref, atol=1e-2, rtol=1e-2), "f32 base path mismatch"

    y1 = jax.block_until_ready(fwd_f32(x, B1))      # non-zero B (post-training)
    y1_ref = lora_linear_ref(x, w, bias, A, B1, alpha)
    assert jnp.allclose(y1, y1_ref, atol=1e-2, rtol=1e-2), "f32 LoRA path mismatch"

    # --- default bf16-fed MXU path, frozen-param prep hoisted out of the call
    wt, bst, bias2 = prepare_lora_linear_params(w, bias, B1, alpha,
                                                compute_dtype=jnp.bfloat16)
    fwd_bf16 = jax.jit(lambda xx, aa, wtt, bstt, bb2:
                       lora_linear_prepared(xx, aa, wtt, bstt, bb2))
    y2 = jax.block_until_ready(fwd_bf16(x, A, wt, bst, bias2))
    y2_ref = lora_linear_ref(x, w, bias, A, B1, alpha)
    assert jnp.allclose(y2, y2_ref, atol=5e-2, rtol=5e-2), "bf16 path mismatch"

    print("KERNEL_OK")
</pallas_src>

<mosaic_0001>
module attributes {stable_mosaic.version = 11 : i64} {
  func.func @_lora_linear_kernel(%arg0: i32, %arg1: i32, %arg2: i32, %arg3: memref<16x256xf32, #tpu.memory_space<vmem>>, %arg4: memref<256x128xf32, #tpu.memory_space<vmem>>, %arg5: memref<16x8xf32, #tpu.memory_space<vmem>>, %arg6: memref<8x128xf32, #tpu.memory_space<vmem>>, %arg7: memref<1x128xf32, #tpu.memory_space<vmem>>, %arg8: memref<16x128xf32, #tpu.memory_space<vmem>>, %arg9: memref<16x128xf32, #tpu.memory_space<vmem>>) attributes {dimension_semantics = [#tpu.dimension_semantics<parallel>, #tpu.dimension_semantics<parallel>, #tpu.dimension_semantics<arbitrary>], iteration_bounds = array<i64: 1, 2, 1>, scalar_prefetch = 0 : i64, scratch_operands = 1 : i64, tpu.core_type = #tpu.core_type<tc>, window_params = [{transform_indices = @transform_0, window_bounds = array<i64: 16, 256>}, {transform_indices = @transform_1, window_bounds = array<i64: 256, 128>}, {transform_indices = @transform_2, window_bounds = array<i64: 16, 8>}, {transform_indices = @transform_3, window_bounds = array<i64: 8, 128>}, {transform_indices = @transform_4, window_bounds = array<i64: 1, 128>}, {transform_indices = @transform_5, window_bounds = array<i64: 16, 128>}]} {
    %c0_i32 = arith.constant 0 : i32
    %0 = arith.cmpi eq, %arg2, %c0_i32 : i32
    %1 = arith.extui %0 : i1 to i32
    %c0_i32_0 = arith.constant 0 : i32
    %2 = arith.cmpi ne, %1, %c0_i32_0 : i32
    scf.if %2 {
      %c0_10 = arith.constant 0 : index
      %c0_11 = arith.constant 0 : index
      %12 = vector.load %arg7[%c0_10, %c0_11] : memref<1x128xf32, #tpu.memory_space<vmem>>, vector<1x128xf32>
      %13 = vector.shape_cast %12 : vector<1x128xf32> to vector<1x128xf32>
      %14 = vector.broadcast %13 : vector<1x128xf32> to vector<16x128xf32>
      %c0_12 = arith.constant 0 : index
      %c0_13 = arith.constant 0 : index
      %15 = vector.load %arg9[%c0_12, %c0_13] : memref<16x128xf32, #tpu.memory_space<vmem>>, vector<16x128xf32>
      tpu.vector_store %arg9[%c0_12, %c0_13], %14 {strides = array<i32>} : memref<16x128xf32, #tpu.memory_space<vmem>>, vector<16x128xf32>,
    } else {
    }
    %c0 = arith.constant 0 : index
    %c0_1 = arith.constant 0 : index
    %3 = vector.load %arg9[%c0, %c0_1] : memref<16x128xf32, #tpu.memory_space<vmem>>, vector<16x128xf32>
    %c0_2 = arith.constant 0 : index
    %c0_3 = arith.constant 0 : index
    %4 = vector.load %arg3[%c0_2, %c0_3] : memref<16x256xf32, #tpu.memory_space<vmem>>, vector<16x256xf32>
    %c0_4 = arith.constant 0 : index
    %c0_5 = arith.constant 0 : index
    %5 = vector.load %arg4[%c0_4, %c0_5] : memref<256x128xf32, #tpu.memory_space<vmem>>, vector<256x128xf32>
    %cst = arith.constant dense<0.000000e+00> : vector<16x128xf32>
    %6 = tpu.matmul %4, %5, %cst {dimension_numbers = #tpu.dot_dimension_numbers<[1], [0], [0], [1], [0, 0, 1, 1], [], []>} : vector<16x256xf32>, vector<256x128xf32>, vector<16x128xf32> -> vector<16x128xf32>
    %7 = arith.addf %3, %6 : vector<16x128xf32>
    %c0_6 = arith.constant 0 : index
    %c0_7 = arith.constant 0 : index
    %8 = vector.load %arg9[%c0_6, %c0_7] : memref<16x128xf32, #tpu.memory_space<vmem>>, vector<16x128xf32>
    tpu.vector_store %arg9[%c0_6, %c0_7], %7 {strides = array<i32>} : memref<16x128xf32, #tpu.memory_space<vmem>>, vector<16x128xf32>,
    %c0_i32_8 = arith.constant 0 : i32
    %9 = arith.cmpi eq, %arg2, %c0_i32_8 : i32
    %10 = arith.extui %9 : i1 to i32
    %c0_i32_9 = arith.constant 0 : i32
    %11 = arith.cmpi ne, %10, %c0_i32_9 : i32
    scf.if %11 {
      %c0_10 = arith.constant 0 : index
      %c0_11 = arith.constant 0 : index
      %12 = vector.load %arg5[%c0_10, %c0_11] : memref<16x8xf32, #tpu.memory_space<vmem>>, vector<16x8xf32>
      %c0_12 = arith.constant 0 : index
      %c0_13 = arith.constant 0 : index
      %13 = vector.load %arg6[%c0_12, %c0_13] : memref<8x128xf32, #tpu.memory_space<vmem>>, vector<8x128xf32>
      %cst_14 = arith.constant dense<0.000000e+00> : vector<16x128xf32>
      %14 = tpu.matmul %12, %13, %cst_14 {dimension_numbers = #tpu.dot_dimension_numbers<[1], [0], [0], [1], [0, 0, 1, 1], [], []>} : vector<16x8xf32>, vector<8x128xf32>, vector<16x128xf32> -> vector<16x128xf32>
      %c0_15 = arith.constant 0 : index
      %c0_16 = arith.constant 0 : index
      %15 = vector.load %arg9[%c0_15, %c0_16] : memref<16x128xf32, #tpu.memory_space<vmem>>, vector<16x128xf32>
      %16 = arith.addf %15, %14 : vector<16x128xf32>
      %c0_17 = arith.constant 0 : index
      %c0_18 = arith.constant 0 : index
      %17 = vector.load %arg8[%c0_17, %c0_18] : memref<16x128xf32, #tpu.memory_space<vmem>>, vector<16x128xf32>
      tpu.vector_store %arg8[%c0_17, %c0_18], %16 {strides = array<i32>} : memref<16x128xf32, #tpu.memory_space<vmem>>, vector<16x128xf32>,
    } else {
    }
    return
  }
  func.func @transform_0(%arg0: i32, %arg1: i32, %arg2: i32) -> (i32, i32) {
    %c0_i32 = arith.constant 0 : i32
    return %arg0, %arg2 : i32, i32
  }
  func.func @transform_1(%arg0: i32, %arg1: i32, %arg2: i32) -> (i32, i32) {
    %c0_i32 = arith.constant 0 : i32
    return %arg2, %arg1 : i32, i32
  }
  func.func @transform_2(%arg0: i32, %arg1: i32, %arg2: i32) -> (i32, i32) {
    %c0_i32 = arith.constant 0 : i32
    %c0_i32_0 = arith.constant 0 : i32
    return %arg0, %c0_i32 : i32, i32
  }
  func.func @transform_3(%arg0: i32, %arg1: i32, %arg2: i32) -> (i32, i32) {
    %c0_i32 = arith.constant 0 : i32
    %c0_i32_0 = arith.constant 0 : i32
    return %c0_i32, %arg1 : i32, i32
  }
  func.func @transform_4(%arg0: i32, %arg1: i32, %arg2: i32) -> (i32, i32) {
    %c0_i32 = arith.constant 0 : i32
    %c0_i32_0 = arith.constant 0 : i32
    return %c0_i32, %arg1 : i32, i32
  }
  func.func @transform_5(%arg0: i32, %arg1: i32, %arg2: i32) -> (i32, i32) {
    %c0_i32 = arith.constant 0 : i32
    return %arg0, %arg1 : i32, i32
  }
}

</mosaic_0001>

<llo_original>
// kernel: _lambda_.1
$region0: #{_lambda_.1}
  #allocation0 [shape = 'u32[]', space=smem, size = 0x4, offset = 0x4, fixed_abs, tag = 'smem constant byte address 0x4 - core index']
  #allocation1 [shape = 'u32[144,128]{1,0:T(1,128)}', space=vmem, size = 0x12000, scoped, tag = 'internal scratch']
  #allocation2 [shape = 'f32[16,128]{1,0:T(8,128)}', space=vmem, size = 0x2000, scoped, tag = 'scratch operand']
  %s0 = inlined_call_operand.vmem [shape: f32[16,256], index: 0, kind: input, shape index: {}]
  %s1 = inlined_call_operand.hbm [shape: f32[256,256], index: 1, kind: input, shape index: {}]
  %s2 = inlined_call_operand.vmem [shape: f32[16,8], index: 2, kind: input, shape index: {}]
  %s3 = inlined_call_operand.vmem [shape: f32[8,256], index: 3, kind: input, shape index: {}]
  %s4 = inlined_call_operand.vmem [shape: f32[1,256], index: 4, kind: input, shape index: {}]
  %s5 = inlined_call_operand.hbm [shape: f32[16,256], index: 5, kind: output, shape index: {}]
  %s6 = sld [smem:[#allocation0]]
  $region65: #{_lambda_.1} parent=0
    _
  %s8 = ssub.s32 1, %s6
  %s9 = scalar_select 0, %s8, %s6
  $region1: #{_lambda_.1} parent=0
    #allocation3 [shape = 'u8[262144]{0}', space=vmem, size = 0x40000, scoped, tag = 'input window, operand 1']
    #allocation4 [shape = 's32[2]{0}', space=sflag, size = 0x8, scoped, tag = 'scoped memory for _lambda_.1']
    #allocation5 [shape = 's32[2]{0}', space=sflag, size = 0x8, scoped, tag = 'scoped memory for _lambda_.1']
    #allocation6 [shape = 'u8[16384]{0}', space=vmem, size = 0x4000, scoped, tag = 'output window, operand 0']
    %10 = vsyncpa [#allocation4], 0
    %s11 = scalar_lea.sflag [#allocation4], 1
    %12 = vsyncpa %s11, 0
    %13 = vsyncpa [#allocation5], 0
    %s14 = scalar_lea.sflag [#allocation5], 1
    %15 = vsyncpa %s14, 0
    loop: start=0, step=1, limit=4
    $region2: #{_lambda_.1} parent=1 // loop_pre_header
      _
    $region3: #{_lambda_.1} parent=1 // loop_header
      %s17 = sphi 0, %s21
      %p18 = scmp.ge.s32.totalorder %s17, 4
      %s24 = sphi 0, %s43
      %s25 = sphi 0, %s39
      %s26 = sphi 0, %s35
      %s27 = sphi 0, %s24
      %s28 = sphi 0, %s25
      %s29 = sphi 0, %s26
      %s30 = sphi 0, %s27
      %s31 = sphi 0, %s28
      %s32 = sphi 0, %s29
      %s48 = sphi 0, %s50
      %s51 = sphi 0, %s48
      %s52 = sphi 0, %s51
      %s68 = sphi 0, %s52
      %s76 = sphi 0, %s78
      %s79 = sphi 0, %s76
      %s80 = sphi 0, %s79
      %s96 = sphi 0, %s80
      %s102 = sphi 0, %s104
      %s105 = sphi 0, %s102
      %s106 = sphi 0, %s105
      %s122 = sphi 0, %s106
      %s128 = sphi 0, %s130
      %s131 = sphi 0, %s128
      %s132 = sphi 0, %s131
      %s148 = sphi 0, %s132
      %s154 = sphi 0, %s156
      %s157 = sphi 0, %s154
      %s158 = sphi 0, %s157
      %s174 = sphi 0, %s158
      %s182 = sphi 0, %s184
      %s185 = sphi 0, %s182
      %s186 = sphi 0, %s185
      %s202 = sphi 0, %s186
    $region4: #{_lambda_.1} parent=1 // loop_header_branch
      %20 = sbr.rel (%p18) target = $region8
    $region5: #{_lambda_.1} parent=1 // loop_body
      %s22 = ssub.s32 %s17, 1
      %s23 = ssub.s32 %s17, 2
      %s33 = sadd.s32 1, %s26
      %p34 = scmp.ge.s32.totalorder %s33, 1
      %s35 = scalar_select %p34, 0, %s33
      %s36 = sadd.s32 1, %s25
      %s37 = scalar_select %p34, %s36, %s25
      %p38 = scmp.ge.s32.totalorder %s37, 2
      %s39 = scalar_select %p38, 0, %s37
      %s40 = sadd.s32 1, %s24
      %s41 = scalar_select %p38, %s40, %s24
      %p42 = scmp.ge.s32.totalorder %s41, 1
      %s43 = scalar_select %p42, 0, %s41
      %s44 = ssub.s32 %s24, %s43
      %s45 = ssub.s32 %s26, %s35
      %s46 = sor.u32 %s44, %s45
      %p47 = scmp.eq.s32.totalorder %s46, 0
      %s49 = sadd.s32 %s48, 1
      %s50 = scalar_select %p47, %s48, %s49
      %p53 = pneg %p47
      %p54 = scmp.eq.s32.totalorder %s17, 1
      %p55 = por %p53, %p54
      %p56 = scmp.ne.s32.totalorder %s48, %s51
      %p57 = scmp.eq.s32.totalorder %s17, 0
      %p58 = por %p56, %p57
      %p59 = scmp.ne.s32.totalorder %s48, %s51
      %p60 = scmp.eq.s32.totalorder %s22, 1
      %p61 = por %p59, %p60
      %p62 = scmp.ne.s32.totalorder %s51, %s52
      %p63 = scmp.eq.s32.totalorder %s22, 0
      %p64 = por %p62, %p63
      %p65 = scmp.ne.s32.totalorder %s51, %s52
      %p66 = scmp.eq.s32.totalorder %s23, 1
      %p67 = por %p65, %p66
      %p69 = scmp.ne.s32.totalorder %s52, %s68
      %p70 = scmp.eq.s32.totalorder %s23, 0
      %p71 = por %p69, %p70
      %s72 = ssub.s32 %s26, %s35
      %s73 = ssub.s32 %s25, %s39
      %s74 = sor.u32 %s72, %s73
      %p75 = scmp.eq.s32.totalorder %s74, 0
      %s77 = sadd.s32 %s76, 1
      %s78 = scalar_select %p75, %s76, %s77
      %p81 = pneg %p75
      %p82 = scmp.eq.s32.totalorder %s17, 1
      %p83 = por %p81, %p82
      %p84 = scmp.ne.s32.totalorder %s76, %s79
      %p85 = scmp.eq.s32.totalorder %s17, 0
      %p86 = por %p84, %p85
      %p87 = scmp.ne.s32.totalorder %s76, %s79
      %p88 = scmp.eq.s32.totalorder %s22, 1
      %p89 = por %p87, %p88
      %p90 = scmp.ne.s32.totalorder %s79, %s80
      %p91 = scmp.eq.s32.totalorder %s22, 0
      %p92 = por %p90, %p91
      %p93 = scmp.ne.s32.totalorder %s79, %s80
      %p94 = scmp.eq.s32.totalorder %s23, 1
      %p95 = por %p93, %p94
      %p97 = scmp.ne.s32.totalorder %s80, %s96
      %p98 = scmp.eq.s32.totalorder %s23, 0
      %p99 = por %p97, %p98
      %s100 = ssub.s32 %s24, %s43
      %p101 = scmp.eq.s32.totalorder %s100, 0
      %s103 = sadd.s32 %s102, 1
      %s104 = scalar_select %p101, %s102, %s103
      %p107 = pneg %p101
      %p108 = scmp.eq.s32.totalorder %s17, 1
      %p109 = por %p107, %p108
      %p110 = scmp.ne.s32.totalorder %s102, %s105
      %p111 = scmp.eq.s32.totalorder %s17, 0
      %p112 = por %p110, %p111
      %p113 = scmp.ne.s32.totalorder %s102, %s105
      %p114 = scmp.eq.s32.totalorder %s22, 1
      %p115 = por %p113, %p114
      %p116 = scmp.ne.s32.totalorder %s105, %s106
      %p117 = scmp.eq.s32.totalorder %s22, 0
      %p118 = por %p116, %p117
      %p119 = scmp.ne.s32.totalorder %s105, %s106
      %p120 = scmp.eq.s32.totalorder %s23, 1
      %p121 = por %p119, %p120
      %p123 = scmp.ne.s32.totalorder %s106, %s122
      %p124 = scmp.eq.s32.totalorder %s23, 0
      %p125 = por %p123, %p124
      %s126 = ssub.s32 %s25, %s39
      %p127 = scmp.eq.s32.totalorder %s126, 0
      %s129 = sadd.s32 %s128, 1
      %s130 = scalar_select %p127, %s128, %s129
      %p133 = pneg %p127
      %p134 = scmp.eq.s32.totalorder %s17, 1
      %p135 = por %p133, %p134
      %p136 = scmp.ne.s32.totalorder %s128, %s131
      %p137 = scmp.eq.s32.totalorder %s17, 0
      %p138 = por %p136, %p137
      %p139 = scmp.ne.s32.totalorder %s128, %s131
      %p140 = scmp.eq.s32.totalorder %s22, 1
      %p141 = por %p139, %p140
      %p142 = scmp.ne.s32.totalorder %s131, %s132
      %p143 = scmp.eq.s32.totalorder %s22, 0
      %p144 = por %p142, %p143
      %p145 = scmp.ne.s32.totalorder %s131, %s132
      %p146 = scmp.eq.s32.totalorder %s23, 1
      %p147 = por %p145, %p146
      %p149 = scmp.ne.s32.totalorder %s132, %s148
      %p150 = scmp.eq.s32.totalorder %s23, 0
      %p151 = por %p149, %p150
      %s152 = ssub.s32 %s25, %s39
      %p153 = scmp.eq.s32.totalorder %s152, 0
      %s155 = sadd.s32 %s154, 1
      %s156 = scalar_select %p153, %s154, %s155
      %p159 = pneg %p153
      %p160 = scmp.eq.s32.totalorder %s17, 1
      %p161 = por %p159, %p160
      %p162 = scmp.ne.s32.totalorder %s154, %s157
      %p163 = scmp.eq.s32.totalorder %s17, 0
      %p164 = por %p162, %p163
      %p165 = scmp.ne.s32.totalorder %s154, %s157
      %p166 = scmp.eq.s32.totalorder %s22, 1
      %p167 = por %p165, %p166
      %p168 = scmp.ne.s32.totalorder %s157, %s158
      %p169 = scmp.eq.s32.totalorder %s22, 0
      %p170 = por %p168, %p169
      %p171 = scmp.ne.s32.totalorder %s157, %s158
      %p172 = scmp.eq.s32.totalorder %s23, 1
      %p173 = por %p171, %p172
      %p175 = scmp.ne.s32.totalorder %s158, %s174
      %p176 = scmp.eq.s32.totalorder %s23, 0
      %p177 = por %p175, %p176
      %s178 = ssub.s32 %s24, %s43
      %s179 = ssub.s32 %s25, %s39
      %s180 = sor.u32 %s178, %s179
      %p181 = scmp.eq.s32.totalorder %s180, 0
      %s183 = sadd.s32 %s182, 1
      %s184 = scalar_select %p181, %s182, %s183
      %p187 = pneg %p181
      %p188 = scmp.eq.s32.totalorder %s17, 1
      %p189 = por %p187, %p188
      %p190 = scmp.ne.s32.totalorder %s182, %s185
      %p191 = scmp.eq.s32.totalorder %s17, 0
      %p192 = por %p190, %p191
      %p193 = scmp.ne.s32.totalorder %s182, %s185
      %p194 = scmp.eq.s32.totalorder %s22, 1
      %p195 = por %p193, %p194
      %p196 = scmp.ne.s32.totalorder %s185, %s186
      %p197 = scmp.eq.s32.totalorder %s22, 0
      %p198 = por %p196, %p197
      %p199 = scmp.ne.s32.totalorder %s185, %s186
      %p200 = scmp.eq.s32.totalorder %s23, 1
      %p201 = por %p199, %p200
      %p203 = scmp.ne.s32.totalorder %s186, %s202
      %p204 = scmp.eq.s32.totalorder %s23, 0
      %p205 = por %p203, %p204
      %p206 = scmp.le.s32.totalorder 1, %s17
      %p207 = scmp.lt.s32.totalorder %s17, 3
      %p208 = pnand %p206, %p207
      %p209 = pneg %p208
      // Predicated region
      $region9: #{_lambda_.1} parent=5 // pred_check
        _
      $region10: #{_lambda_.1} parent=5 // pred_check_branch
        %211 = sbr.rel (%p208) target = $region12
      $region11: #{_lambda_.1} parent=5 // pred_region
        %s212 = ssub.s32 %s17, 1
        // Predicated region
        $region13: #{_lambda_.1} parent=11 // pred_check
          %p213 = pneg %p64
        $region14: #{_lambda_.1} parent=11 // pred_check_branch
          %215 = sbr.rel (%p213) target = $region16
        $region15: #{_lambda_.1} parent=11 // pred_region
          %s216 = smul.u32 2, %s27
          %s217 = smul.u32 2, %s29
          %p218 = scmp.lt.s32.totalorder %s216, 1
          %s219 = scalar_select %p218, %s216, 1
          %p220 = scmp.lt.s32.totalorder %s217, 1
          %s221 = scalar_select %p220, %s217, 1
          %s222 = smul.addr %s219, 2
          %s223 = sadd.s32 %s221, %s222
          %s224 = smul.addr %s223, 8
          %s225 = scalar_lea.vmem %s0, %s224
          %s226 = smul.u32 2, %s27
          %s227 = smul.u32 2, %s29
        $region16: #{_lambda_.1} parent=11 // pred_fallthru
          _
        // Predicated region
        $region17: #{_lambda_.1} parent=11 // pred_check
          %p228 = pneg %p118
        $region18: #{_lambda_.1} parent=11 // pred_check_branch
          %230 = sbr.rel (%p228) target = $region20
        $region19: #{_lambda_.1} parent=11 // pred_region
          %s231 = smul.u32 2, %s27
          %p232 = scmp.lt.s32.totalorder %s231, 1
          %s233 = scalar_select %p232, %s231, 1
          %s234 = smul.addr %s233, 8
          %s235 = scalar_lea.vmem %s2, %s234
          %s236 = smul.u32 2, %s27
        $region20: #{_lambda_.1} parent=11 // pred_fallthru
          _
      $region12: #{_lambda_.1} parent=5 // pred_fallthru
        _
      %p237 = scmp.lt.s32.totalorder %s17, 2
      // Predicated region
      $region21: #{_lambda_.1} parent=5 // pred_check
        %p238 = pneg %p237
      $region22: #{_lambda_.1} parent=5 // pred_check_branch
        %240 = sbr.rel (%p238) target = $region24
      $region23: #{_lambda_.1} parent=5 // pred_region
        // Predicated region
        $region25: #{_lambda_.1} parent=23 // pred_check
          %p241 = pneg %p86
        $region26: #{_lambda_.1} parent=23 // pred_check_branch
          %243 = sbr.rel (%p241) target = $region28
        $region27: #{_lambda_.1} parent=23 // pred_region
          %s244 = sand.u32 %s76, 1
          %s245 = scalar_lea.sflag [#allocation4], %s244
          %s246 = sand.u32 %s76, 1
          %s247 = smul.addr %s246, 256
          %s248 = scalar_lea.vmem [#allocation3], %s247
          %s249 = smul.u32 32, %s26
          %s251 = ssub.s32 4096, 4096
          %252 = vsyncadd %s245, %s251
          %s253 = smul.addr %s249, 2
          %s254 = sadd.s32 %s25, %s253
          %s255 = smul.addr %s254, 128
          %s256 = scalar_lea.hbm %s1, %s255
          %s257 = sshll.u32 %s248, 4
          %s258 = int_to_ptr.vmem [resolvable:$true] %s257
          %263 = dma.hbm_to_vmem [thread:$0]  %s256, 4096, %s258, %s245, 256, 128, 8
        $region28: #{_lambda_.1} parent=23 // pred_fallthru
          _
        // Predicated region
        $region29: #{_lambda_.1} parent=23 // pred_check
          %p264 = pneg %p138
        $region30: #{_lambda_.1} parent=23 // pred_check_branch
          %266 = sbr.rel (%p264) target = $region32
        $region31: #{_lambda_.1} parent=23 // pred_region
          %p267 = scmp.lt.s32.totalorder %s25, 1
          %s268 = scalar_select %p267, %s25, 1
          %s269 = smul.addr %s268, 8
          %s270 = scalar_lea.vmem %s3, %s269
        $region32: #{_lambda_.1} parent=23 // pred_fallthru
          _
        // Predicated region
        $region33: #{_lambda_.1} parent=23 // pred_check
          %p271 = pneg %p164
        $region34: #{_lambda_.1} parent=23 // pred_check_branch
          %273 = sbr.rel (%p271) target = $region36
        $region35: #{_lambda_.1} parent=23 // pred_region
          %p274 = scmp.lt.s32.totalorder %s25, 1
          %s275 = scalar_select %p274, %s25, 1
          %s276 = scalar_lea.vmem %s4, %s275
        $region36: #{_lambda_.1} parent=23 // pred_fallthru
          _
      $region24: #{_lambda_.1} parent=5 // pred_fallthru
        _
      %p277 = scmp.le.s32.totalorder 1, %s17
      %p278 = scmp.lt.s32.totalorder %s17, 3
      %p279 = pnand %p277, %p278
      %p280 = pneg %p279
      // Predicated region
      $region37: #{_lambda_.1} parent=5 // pred_check
        _
      $region38: #{_lambda_.1} parent=5 // pred_check_branch
        %282 = sbr.rel (%p279) target = $region40
      $region39: #{_lambda_.1} parent=5 // pred_region
        %s283 = ssub.s32 %s17, 1
        %s284 = sand.u32 %s79, 1
        %s285 = scalar_lea.sflag [#allocation4], %s284
        %s286 = sand.u32 %s79, 1
        %s287 = smul.addr %s286, 256
        %s288 = scalar_lea.vmem [#allocation3], %s287
        // Predicated region
        $region41: #{_lambda_.1} parent=39 // pred_check
          %p289 = pneg %p92
        $region42: #{_lambda_.1} parent=39 // pred_check_branch
          %291 = sbr.rel (%p289) target = $region44
        $region43: #{_lambda_.1} parent=39 // pred_region
          %292 = dma.done %s285, 4096
        $region44: #{_lambda_.1} parent=39 // pred_fallthru
          _
        %s293 = smul.u32 2, %s27
        %s294 = smul.u32 2, %s29
        %p295 = scmp.lt.s32.totalorder %s293, 1
        %s296 = scalar_select %p295, %s293, 1
        %p297 = scmp.lt.s32.totalorder %s294, 1
        %s298 = scalar_select %p297, %s294, 1
        %s299 = smul.addr %s296, 2
        %s300 = sadd.s32 %s298, %s299
        %s301 = smul.addr %s300, 8
        %s302 = scalar_lea.vmem %s0, %s301
        %p303 = pneg %p64
        %p304 = pneg %p61
        %s305 = sand.u32 %s79, 1
        %s306 = scalar_lea.sflag [#allocation4], %s305
        %s307 = sand.u32 %s79, 1
        %s308 = smul.addr %s307, 256
        %s309 = scalar_lea.vmem [#allocation3], %s308
        %p310 = pneg %p92
        %p311 = pneg %p89
        %s312 = smul.u32 2, %s27
        %p313 = scmp.lt.s32.totalorder %s312, 1
        %s314 = scalar_select %p313, %s312, 1
        %s315 = smul.addr %s314, 8
        %s316 = scalar_lea.vmem %s2, %s315
        %p317 = pneg %p118
        %p318 = pneg %p115
        %p319 = scmp.lt.s32.totalorder %s28, 1
        %s320 = scalar_select %p319, %s28, 1
        %s321 = smul.addr %s320, 8
        %s322 = scalar_lea.vmem %s3, %s321
        %p323 = pneg %p144
        %p324 = pneg %p141
        %p325 = scmp.lt.s32.totalorder %s28, 1
        %s326 = scalar_select %p325, %s28, 1
        %s327 = scalar_lea.vmem %s4, %s326
        %p328 = pneg %p170
        %p329 = pneg %p167
        %p330 = pneg %p198
        %p331 = pneg %p195
        %s332 = sand.u32 %s185, 1
        %s333 = scalar_lea.sflag [#allocation5], %s332
        %s334 = sand.u32 %s185, 1
        %s335 = smul.addr %s334, 16
        %s336 = scalar_lea.vmem [#allocation6], %s335
        %s337 = smul.u32 2, %s27
        %s338 = smul.u32 2, %s29
        %p339 = scmp.lt.s32.totalorder %s337, 1
        %s340 = scalar_select %p339, %s337, 1
        %p341 = scmp.lt.s32.totalorder %s338, 1
        %s342 = scalar_select %p341, %s338, 1
        %s343 = smul.addr %s340, 2
        %s344 = sadd.s32 %s342, %s343
        %s345 = smul.addr %s344, 8
        %s346 = scalar_lea.vmem %s0, %s345
        %s347 = smul.u32 2, %s27
        %s348 = smul.u32 2, %s29
        %s349 = smul.u32 32, %s29
        %s350 = smul.u32 2, %s27
        %p351 = scmp.lt.s32.totalorder %s350, 1
        %s352 = scalar_select %p351, %s350, 1
        %s353 = smul.addr %s352, 8
        %s354 = scalar_lea.vmem %s2, %s353
        %s355 = smul.u32 2, %s27
        %p356 = scmp.lt.s32.totalorder %s28, 1
        %s357 = scalar_select %p356, %s28, 1
        %s358 = smul.addr %s357, 8
        %s359 = scalar_lea.vmem %s3, %s358
        %p360 = scmp.lt.s32.totalorder %s28, 1
        %s361 = scalar_select %p360, %s28, 1
        %s362 = scalar_lea.vmem %s4, %s361
        %s363 = smul.u32 2, %s27
        %p364 = scmp.eq.s32.totalorder %s29, 0
        // Predicated region
        $region45: #{_lambda_.1} parent=39 // pred_check
          %p365 = pneg %p364
        $region46: #{_lambda_.1} parent=39 // pred_check_branch
          %367 = sbr.rel (%p365) target = $region48
        $region47: #{_lambda_.1} parent=39 // pred_region
          %v368 = vld [vmem:[%s362] sm:$0x1]
          %v370 = vlaneseq
          %v371 = vshrl.u32 %v370, 7
          %v372 = vsub.s32 0, %v371
          %v373 = vrot.slane %v368, %v372
          %375 = vst [vmem:[#allocation2] sm:$0xff] %v373
          %376 = vst [vmem:[#allocation2 + $0x8] sm:$0xff] %v373
        $region48: #{_lambda_.1} parent=39 // pred_fallthru
          _
        %v377 = vld [vmem:[#allocation2] sm:$0xff]
        %v378 = vld [vmem:[#allocation2 + $0x8] sm:$0xff]
        %v379 = vld [vmem:[%s346] sm:$0xff]
        %v380 = vld [vmem:[%s346 + $0x8] sm:$0xff]
        %v381 = vld [vmem:[%s346 + $0x10] sm:$0xff]
        %v382 = vld [vmem:[%s346 + $0x18] sm:$0xff]
        %v383 = vld [vmem:[%s288] sm:$0xff]
        %v384 = vld [vmem:[%s288 + $0x8] sm:$0xff]
        %v385 = vld [vmem:[%s288 + $0x10] sm:$0xff]
        %v386 = vld [vmem:[%s288 + $0x18] sm:$0xff]
        %v387 = vld [vmem:[%s288 + $0x20] sm:$0xff]
        %v388 = vld [vmem:[%s288 + $0x28] sm:$0xff]
        %v389 = vld [vmem:[%s288 + $0x30] sm:$0xff]
        %v390 = vld [vmem:[%s288 + $0x38] sm:$0xff]
        %v391 = vld [vmem:[%s288 + $0x40] sm:$0xff]
        %v392 = vld [vmem:[%s288 + $0x48] sm:$0xff]
        %v393 = vld [vmem:[%s288 + $0x50] sm:$0xff]
        %v394 = vld [vmem:[%s288 + $0x58] sm:$0xff]
        %v395 = vld [vmem:[%s288 + $0x60] sm:$0xff]
        %v396 = vld [vmem:[%s288 + $0x68] sm:$0xff]
        %v397 = vld [vmem:[%s288 + $0x70] sm:$0xff]
        %v398 = vld [vmem:[%s288 + $0x78] sm:$0xff]
        %v399 = vld [vmem:[%s288 + $0x80] sm:$0xff]
        %v400 = vld [vmem:[%s288 + $0x88] sm:$0xff]
        %v401 = vld [vmem:[%s288 + $0x90] sm:$0xff]
        %v402 = vld [vmem:[%s288 + $0x98] sm:$0xff]
        %v403 = vld [vmem:[%s288 + $0xa0] sm:$0xff]
        %v404 = vld [vmem:[%s288 + $0xa8] sm:$0xff]
        %v405 = vld [vmem:[%s288 + $0xb0] sm:$0xff]
        %v406 = vld [vmem:[%s288 + $0xb8] sm:$0xff]
        %v407 = vld [vmem:[%s288 + $0xc0] sm:$0xff]
        %v408 = vld [vmem:[%s288 + $0xc8] sm:$0xff]
        %v409 = vld [vmem:[%s288 + $0xd0] sm:$0xff]
        %v410 = vld [vmem:[%s288 + $0xd8] sm:$0xff]
        %v411 = vld [vmem:[%s288 + $0xe0] sm:$0xff]
        %v412 = vld [vmem:[%s288 + $0xe8] sm:$0xff]
        %v413 = vld [vmem:[%s288 + $0xf0] sm:$0xff]
        %v414 = vld [vmem:[%s288 + $0xf8] sm:$0xff]
        %415 = vmatprep.subr.mxu0 0.0
        %416 = vmatpush1.msra.mxu0 %v383
        %417 = vmatprep.subr.mxu0 0.0
        %418 = vmatpush1.msra.mxu0 %v384
        %419 = vmatprep.subr.mxu0 0.0
        %420 = vmatpush1.msra.mxu0 %v385
        %421 = vmatprep.subr.mxu0 0.0
        %422 = vmatpush1.msra.mxu0 %v386
        %423 = vmatprep.subr.mxu0 0.0
        %424 = vmatpush1.msra.mxu0 %v387
        %425 = vmatprep.subr.mxu0 0.0
        %426 = vmatpush1.msra.mxu0 %v388
        %427 = vmatprep.subr.mxu0 0.0
        %428 = vmatpush1.msra.mxu0 %v389
        %429 = vmatprep.subr.mxu0 0.0
        %430 = vmatpush1.msra.mxu0 %v390
        %431 = vmatprep.subr.mxu0 0.0
        %432 = vmatpush1.msra.mxu0 %v391
        %433 = vmatprep.subr.mxu0 0.0
        %434 = vmatpush1.msra.mxu0 %v392
        %435 = vmatprep.subr.mxu0 0.0
        %436 = vmatpush1.msra.mxu0 %v393
        %437 = vmatprep.subr.mxu0 0.0
        %438 = vmatpush1.msra.mxu0 %v394
        %439 = vmatprep.subr.mxu0 0.0
        %440 = vmatpush1.msra.mxu0 %v395
        %441 = vmatprep.subr.mxu0 0.0
        %442 = vmatpush1.msra.mxu0 %v396
        %443 = vmatprep.subr.mxu0 0.0
        %444 = vmatpush1.msra.mxu0 %v397
        %445 = vmatprep.subr.mxu0 0.0
        %446 = vmatpush1.msra.mxu0 %v398
        %447 = vmatprep.subr.mxu0 0.0
        %448 = vmatpush1.msra.mxu0 %v399
        %449 = vmatprep.subr.mxu0 0.0
        %450 = vmatpush1.msra.mxu0 %v400
        %451 = vmatprep.subr.mxu0 0.0
        %452 = vmatpush1.msra.mxu0 %v401
        %453 = vmatprep.subr.mxu0 0.0
        %454 = vmatpush1.msra.mxu0 %v402
        %455 = vmatprep.subr.mxu0 0.0
        %456 = vmatpush1.msra.mxu0 %v403
        %457 = vmatprep.subr.mxu0 0.0
        %458 = vmatpush1.msra.mxu0 %v404
        %459 = vmatprep.subr.mxu0 0.0
        %460 = vmatpush1.msra.mxu0 %v405
        %461 = vmatprep.subr.mxu0 0.0
        %462 = vmatpush1.msra.mxu0 %v406
        %463 = vmatprep.subr.mxu0 0.0
        %464 = vmatpush1.msra.mxu0 %v407
        %465 = vmatprep.subr.mxu0 0.0
        %466 = vmatpush1.msra.mxu0 %v408
        %467 = vmatprep.subr.mxu0 0.0
        %468 = vmatpush1.msra.mxu0 %v409
        %469 = vmatprep.subr.mxu0 0.0
        %470 = vmatpush1.msra.mxu0 %v410
        %471 = vmatprep.subr.mxu0 0.0
        %472 = vmatpush1.msra.mxu0 %v411
        %473 = vmatprep.subr.mxu0 0.0
        %474 = vmatpush1.msra.mxu0 %v412
        %475 = vmatprep.subr.mxu0 0.0
        %476 = vmatpush1.msra.mxu0 %v413
        %477 = vmatprep.subr.mxu0 0.0
        %478 = vmatpush1.msra.mxu0 %v414
        %479 = vmatprep.mubr.f32.mxu0 %v380
        %480 = vmatmul.mubr.f32.gmra.mrb[0].mxu0 %v379
        %v481 = vpop.f32.mrb[0].mxu0
        %v482 = vadd.f32 0.0, %v481
        %v483 = vpop.f32.mrb[0].mxu0
        %484 = vmatprep.mubr.f32.mxu0 %v382
        %485 = vmatmul.mubr.f32.gmra.mrb[0].mxu0 %v381
        %v486 = vpop.f32.mrb[0].mxu0
        %v487 = vadd.f32 0.0, %v486
        %v488 = vpop.f32.mrb[0].mxu0
        %489 = vdwg.mxu0
        %v490 = vadd.f32 %v377, %v482
        %v491 = vadd.f32 %v378, %v487
        %492 = vst [vmem:[#allocation2] sm:$0xff] %v490
        %493 = vst [vmem:[#allocation2 + $0x8] sm:$0xff] %v491
        // Predicated region
        $region49: #{_lambda_.1} parent=39 // pred_check
          %p494 = pneg %p364
        $region50: #{_lambda_.1} parent=39 // pred_check_branch
          %496 = sbr.rel (%p494) target = $region52
        $region51: #{_lambda_.1} parent=39 // pred_region
          %v497 = vld [vmem:[%s354] sm:$0xff]
          %v498 = vld [vmem:[%s354 + $0x8] sm:$0xff]
          %v499 = vld [vmem:[%s359] sm:$0xff]
          %vm500 = vcmask 64512
          %v502 = vsel %vm500, %v497, 0
          %v505 = vsel %vm500, %v498, 0
          %507 = vmatprep.subr.mxu0 0.0
          %508 = vmatpush1.msra.mxu0 %v499
          %509 = vmatprep.subr.mxu0 0.0
          %510 = vmatpush1.msra.mxu0 0.0
          %511 = vmatprep.subr.mxu0 0.0
          %512 = vmatpush1.msra.mxu0 0.0
          %513 = vmatprep.subr.mxu0 0.0
          %514 = vmatpush1.msra.mxu0 0.0
          %515 = vmatprep.subr.mxu0 0.0
          %516 = vmatpush1.msra.mxu0 0.0
          %517 = vmatprep.subr.mxu0 0.0
          %518 = vmatpush1.msra.mxu0 0.0
          %519 = vmatprep.subr.mxu0 0.0
          %520 = vmatpush1.msra.mxu0 0.0
          %521 = vmatprep.subr.mxu0 0.0
          %522 = vmatpush1.msra.mxu0 0.0
          %523 = vmatprep.subr.mxu0 0.0
          %524 = vmatpush1.msra.mxu0 0.0
          %525 = vmatprep.subr.mxu0 0.0
          %526 = vmatpush1.msra.mxu0 0.0
          %527 = vmatprep.subr.mxu0 0.0
          %528 = vmatpush1.msra.mxu0 0.0
          %529 = vmatprep.subr.mxu0 0.0
          %530 = vmatpush1.msra.mxu0 0.0
          %531 = vmatprep.subr.mxu0 0.0
          %532 = vmatpush1.msra.mxu0 0.0
          %533 = vmatprep.subr.mxu0 0.0
          %534 = vmatpush1.msra.mxu0 0.0
          %535 = vmatprep.subr.mxu0 0.0
          %536 = vmatpush1.msra.mxu0 0.0
          %537 = vmatprep.subr.mxu0 0.0
          %538 = vmatpush1.msra.mxu0 0.0
          %539 = vmatprep.subr.mxu0 0.0
          %540 = vmatpush1.msra.mxu0 0.0
          %541 = vmatprep.subr.mxu0 0.0
          %542 = vmatpush1.msra.mxu0 0.0
          %543 = vmatprep.subr.mxu0 0.0
          %544 = vmatpush1.msra.mxu0 0.0
          %545 = vmatprep.subr.mxu0 0.0
          %546 = vmatpush1.msra.mxu0 0.0
          %547 = vmatprep.subr.mxu0 0.0
          %548 = vmatpush1.msra.mxu0 0.0
          %549 = vmatprep.subr.mxu0 0.0
          %550 = vmatpush1.msra.mxu0 0.0
          %551 = vmatprep.subr.mxu0 0.0
          %552 = vmatpush1.msra.mxu0 0.0
          %553 = vmatprep.subr.mxu0 0.0
          %554 = vmatpush1.msra.mxu0 0.0
          %555 = vmatprep.subr.mxu0 0.0
          %556 = vmatpush1.msra.mxu0 0.0
          %557 = vmatprep.subr.mxu0 0.0
          %558 = vmatpush1.msra.mxu0 0.0
          %559 = vmatprep.subr.mxu0 0.0
          %560 = vmatpush1.msra.mxu0 0.0
          %561 = vmatprep.subr.mxu0 0.0
          %562 = vmatpush1.msra.mxu0 0.0
          %563 = vmatprep.subr.mxu0 0.0
          %564 = vmatpush1.msra.mxu0 0.0
          %565 = vmatprep.subr.mxu0 0.0
          %566 = vmatpush1.msra.mxu0 0.0
          %567 = vmatprep.subr.mxu0 0.0
          %568 = vmatpush1.msra.mxu0 0.0
          %569 = vmatprep.subr.mxu0 0.0
          %570 = vmatpush1.msra.mxu0 0.0
          %571 = vmatprep.mubr.f32.mxu0 0.0
          %572 = vmatmul.mubr.f32.gmra.mrb[0].mxu0 %v502
          %v573 = vpop.f32.mrb[0].mxu0
          %v574 = vadd.f32 0.0, %v573
          %v575 = vpop.f32.mrb[0].mxu0
          %576 = vmatprep.mubr.f32.mxu0 0.0
          %577 = vmatmul.mubr.f32.gmra.mrb[0].mxu0 %v505
          %v578 = vpop.f32.mrb[0].mxu0
          %v579 = vadd.f32 0.0, %v578
          %v580 = vpop.f32.mrb[0].mxu0
          %581 = vdwg.mxu0
          %v582 = vld [vmem:[#allocation2] sm:$0xff]
          %v583 = vld [vmem:[#allocation2 + $0x8] sm:$0xff]
          %v584 = vadd.f32 %v582, %v574
          %v585 = vadd.f32 %v583, %v579
          %586 = vst [vmem:[%s336] sm:$0xff] %v584
          %587 = vst [vmem:[%s336 + $0x8] sm:$0xff] %v585
        $region52: #{_lambda_.1} parent=39 // pred_fallthru
          _
        %s588 = sand.u32 %s185, 1
        %s589 = scalar_lea.sflag [#allocation5], %s588
        %s590 = sand.u32 %s185, 1
        %s591 = smul.addr %s590, 16
        %s592 = scalar_lea.vmem [#allocation6], %s591
        // Predicated region
        $region53: #{_lambda_.1} parent=39 // pred_check
          %p593 = pneg %p195
        $region54: #{_lambda_.1} parent=39 // pred_check_branch
          %595 = sbr.rel (%p593) target = $region56
        $region55: #{_lambda_.1} parent=39 // pred_region
          %s596 = smul.u32 2, %s27
          %s598 = ssub.s32 256, 256
          %599 = vsyncadd %s589, %s598
          %s600 = smul.addr %s596, 2
          %s601 = sadd.s32 %s28, %s600
          %s602 = smul.addr %s601, 128
          %s603 = scalar_lea.hbm %s5, %s602
          %s604 = sshll.u32 %s592, 4
          %s605 = int_to_ptr.vmem [resolvable:$true] %s604
          %610 = dma.vmem_to_hbm [thread:$0]  %s605, 256, %s603, %s589, 128, 256, 8
        $region56: #{_lambda_.1} parent=39 // pred_fallthru
          _
      $region40: #{_lambda_.1} parent=5 // pred_fallthru
        _
      %p611 = scmp.le.s32.totalorder 2, %s17
      // Predicated region
      $region57: #{_lambda_.1} parent=5 // pred_check
        %p612 = pneg %p611
      $region58: #{_lambda_.1} parent=5 // pred_check_branch
        %614 = sbr.rel (%p612) target = $region60
      $region59: #{_lambda_.1} parent=5 // pred_region
        %s615 = ssub.s32 %s17, 2
        // Predicated region
        $region61: #{_lambda_.1} parent=59 // pred_check
          %p616 = pneg %p201
        $region62: #{_lambda_.1} parent=59 // pred_check_branch
          %618 = sbr.rel (%p616) target = $region64
        $region63: #{_lambda_.1} parent=59 // pred_region
          %s619 = sand.u32 %s186, 1
          %s620 = scalar_lea.sflag [#allocation5], %s619
          %s621 = sand.u32 %s186, 1
          %s622 = smul.addr %s621, 16
          %s623 = scalar_lea.vmem [#allocation6], %s622
          %624 = dma.done %s620, 256
        $region64: #{_lambda_.1} parent=59 // pred_fallthru
          _
      $region60: #{_lambda_.1} parent=5 // pred_fallthru
        _
    $region6: #{_lambda_.1} parent=1 // loop_footer
      %s21 = sadd.s32 1, %s17
    $region7: #{_lambda_.1} parent=1 // loop_footer_branch
      %16 = sbr.rel target = $region3
    $region8: #{_lambda_.1} parent=1 // loop_exit
      _
    %625 = vsyncpa [#allocation4], 1
    %s626 = scalar_lea.sflag [#allocation4], 1
    %627 = vsyncpa %s626, 1
    %628 = vsyncpa [#allocation5], 1
    %s629 = scalar_lea.sflag [#allocation5], 1
    %630 = vsyncpa %s629, 1

</llo_original>
